<compile_context>
chip_gen: v7x
topology: tpu7x:2x2x1
jax: 0.10.0
libtpu: 0.0.40
codegen_flags: <defaults>
</compile_context>

<pallas_src>
import functools

import jax
import jax.numpy as jnp
from jax.experimental import pallas as pl
from jax.experimental.pallas import tpu as pltpu

_HALF_FLOAT_DTYPES = (jnp.dtype(jnp.float16), jnp.dtype(jnp.bfloat16))


def _rmsnorm_kernel(x_ref, w_ref, o_ref, *, eps):
    # Reference: variance = mean(x.float32 ** 2, -1); x * rsqrt(var + eps)
    # (multiply promotes to f32); cast to weight dtype iff weight is half
    # precision; then weight * x.
    xf = x_ref[...].astype(jnp.float32)
    var = jnp.mean(xf * xf, axis=-1, keepdims=True)
    h = xf * jax.lax.rsqrt(var + eps)                 # f32 normalized rows
    w = w_ref[...]
    if jnp.dtype(w.dtype) in _HALF_FLOAT_DTYPES:
        h = h.astype(w.dtype)                         # cast before weight mul
    o_ref[...] = (w * h).astype(o_ref.dtype)


def _generation_params():
    """(block budget bytes, vmem_limit_bytes) per TPU generation."""
    try:
        cap = int(pltpu.get_tpu_info().vmem_capacity_bytes)
    except Exception:
        cap = 64 << 20                      # be conservative if query fails
    if cap >= (128 << 20):                  # v5e / v6e: 128 MiB physical VMEM
        return 24 << 20, 64 << 20
    # v7x (64 MiB per TensorCore) or unknown-small: keep the working set and
    # scoped limit well under physical VMEM so double-buffering is preserved.
    return 12 << 20, 48 << 20


def _choose_block_rows(n_rows, hidden, in_itemsize, out_itemsize, budget):
    """Row tile: largest sublane-aligned tile whose double-buffered in/out
    blocks *plus the in-kernel f32 temporaries* fit the budget, further capped
    so the grid has >=~4 steps (pipelining + v7x dual-TC sharding)."""
    # 2x for double-buffered input+output blocks; + 2 * 4 bytes/elem for the
    # f32 upcast and f32 product that live inside the kernel body.
    bytes_per_row = hidden * (in_itemsize + out_itemsize) * 2 + hidden * 2 * 4
    max_rows = max(8, (budget // max(bytes_per_row, 1)) // 8 * 8)
    if n_rows <= 8:
        return n_rows                       # tiny input: single full block
    # Never collapse to a single grid step: target ~4 steps (even count so the
    # "parallel" axis shards cleanly across both TensorCores on v7x).
    target = max(8, (n_rows // 4) // 8 * 8)
    return max(8, min(max_rows, target))


def llama_rmsnorm(hidden_states, weight, eps=1e-6, block_rows=None):
    """LlamaRMSNorm forward.  hidden_states: (..., H); weight: (H,)."""
    orig_shape = hidden_states.shape
    H = orig_shape[-1]
    x2d = hidden_states.reshape(-1, H)
    M = x2d.shape[0]
    w2d = weight.reshape(1, H)

    w_is_half = jnp.dtype(weight.dtype) in _HALF_FLOAT_DTYPES
    out_dtype = (weight.dtype if w_is_half
                 else jnp.promote_types(hidden_states.dtype, jnp.float32))

    budget, vmem_limit = _generation_params()
    if block_rows is None:
        block_rows = _choose_block_rows(
            M, H, jnp.dtype(x2d.dtype).itemsize,
            jnp.dtype(out_dtype).itemsize, budget)
    tm = min(block_rows, M)
    if tm < M and tm % 8 != 0:
        # (8,128) constraint: a partial (non-full-extent) row tile must be a
        # multiple of 8 sublanes.
        tm = max(8, (tm // 8) * 8)
    grid = (pl.cdiv(M, tm),)

    out2d = pl.pallas_call(
        functools.partial(_rmsnorm_kernel, eps=eps),
        grid=grid,
        in_specs=[pl.BlockSpec((tm, H), lambda i: (i, 0)),
                  pl.BlockSpec((1, H), lambda i: (0, 0))],   # weight resident
        out_specs=pl.BlockSpec((tm, H), lambda i: (i, 0)),
        out_shape=jax.ShapeDtypeStruct((M, H), out_dtype),
        compiler_params=pltpu.CompilerParams(
            dimension_semantics=("parallel",),
            vmem_limit_bytes=vmem_limit),
    )(x2d, w2d)
    return out2d.reshape(orig_shape)


# ---------------- pure-JAX reference (mirrors the PyTorch/hidet module) -----
def rmsnorm_reference(hidden_states, weight, eps=1e-6):
    xf = hidden_states.astype(jnp.float32)
    var = jnp.mean(xf * xf, axis=-1, keepdims=True)
    h = xf * jax.lax.rsqrt(var + eps)
    if jnp.dtype(weight.dtype) in _HALF_FLOAT_DTYPES:
        h = h.astype(weight.dtype)
    return weight * h


if __name__ == "__main__":
    key = jax.random.PRNGKey(0)
    k1, k2, k3, k4 = jax.random.split(key, 4)
    eps = 1e-6

    # Case 1: f32 activations, random f32 weight, explicit 32-row tile
    # (M=128 -> grid=(4,): pipelined + shardable across TCs).
    B, S, H = 2, 64, 128
    x_f32 = jax.random.normal(k1, (B, S, H), jnp.float32)
    w_f32 = 1.0 + 0.02 * jax.random.normal(k2, (H,), jnp.float32)
    y = llama_rmsnorm(x_f32, w_f32, eps, block_rows=32)
    y_ref = rmsnorm_reference(x_f32, w_f32, eps)
    jax.block_until_ready(y)
    assert y.shape == (B, S, H) and y.dtype == jnp.float32
    assert jnp.allclose(y, y_ref, atol=1e-5, rtol=1e-5)

    # Case 2: bf16 activations + bf16 weight, auto block chooser
    # (exercises the generation-aware budget and the >=4-step grid cap).
    x_bf16 = jax.random.normal(k3, (B, S, H), jnp.float32).astype(jnp.bfloat16)
    w_bf16 = jnp.ones((H,), jnp.bfloat16)
    y16 = llama_rmsnorm(x_bf16, w_bf16, eps)
    y16_ref = rmsnorm_reference(x_bf16, w_bf16, eps)
    jax.block_until_ready(y16)
    assert y16.dtype == jnp.bfloat16
    assert jnp.allclose(y16.astype(jnp.float32), y16_ref.astype(jnp.float32),
                        atol=2e-2, rtol=2e-2)

    # Case 3: ragged row count (M=120) with a user block_rows that is NOT a
    # multiple of 8 -> rounded down to 24; last grid block is partial/masked.
    x_rag = jax.random.normal(k4, (2, 60, H), jnp.float32)
    y_rag = llama_rmsnorm(x_rag, w_f32, eps, block_rows=30)
    y_rag_ref = rmsnorm_reference(x_rag, w_f32, eps)
    jax.block_until_ready(y_rag)
    assert jnp.allclose(y_rag, y_rag_ref, atol=1e-5, rtol=1e-5)

    # Case 4: tiny M (<= 8 rows) -> single full-extent block, still correct.
    x_tiny = jax.random.normal(k1, (1, 4, H), jnp.float32)
    y_tiny = llama_rmsnorm(x_tiny, w_f32, eps)
    jax.block_until_ready(y_tiny)
    assert jnp.allclose(y_tiny, rmsnorm_reference(x_tiny, w_f32, eps),
                        atol=1e-5, rtol=1e-5)

    print("KERNEL_OK")
</pallas_src>

<mosaic_0001>
module attributes {stable_mosaic.version = 11 : i64} {
  func.func @_rmsnorm_kernel(%arg0: i32, %arg1: memref<32x128xf32, #tpu.memory_space<vmem>>, %arg2: memref<1x128xf32, #tpu.memory_space<vmem>>, %arg3: memref<32x128xf32, #tpu.memory_space<vmem>>) attributes {dimension_semantics = [#tpu.dimension_semantics<parallel>], iteration_bounds = array<i64: 4>, scalar_prefetch = 0 : i64, scratch_operands = 0 : i64, tpu.core_type = #tpu.core_type<tc>, window_params = [{transform_indices = @transform_0, window_bounds = array<i64: 32, 128>}, {pipeline_mode = #tpu.pipeline_mode<synchronous>, transform_indices = @transform_1, window_bounds = array<i64: 1, 128>}, {transform_indices = @transform_2, window_bounds = array<i64: 32, 128>}]} {
    %c0 = arith.constant 0 : index
    %c0_0 = arith.constant 0 : index
    %0 = vector.load %arg1[%c0, %c0_0] : memref<32x128xf32, #tpu.memory_space<vmem>>, vector<32x128xf32>
    %1 = arith.mulf %0, %0 : vector<32x128xf32>
    %cst = arith.constant dense<0.000000e+00> : vector<32xf32>
    %2 = vector.multi_reduction <add>, %1, %cst [1] : vector<32x128xf32> to vector<32xf32>
    %3 = vector.shape_cast %2 : vector<32xf32> to vector<32x1xf32>
    %cst_1 = arith.constant 1.280000e+02 : f32
    %4 = vector.broadcast %cst_1 : f32 to vector<32x1xf32>
    %5 = arith.divf %3, %4 : vector<32x1xf32>
    %cst_2 = arith.constant 9.99999997E-7 : f32
    %6 = vector.broadcast %cst_2 : f32 to vector<32x1xf32>
    %7 = arith.addf %5, %6 : vector<32x1xf32>
    %8 = math.rsqrt %7 : vector<32x1xf32>
    %9 = vector.broadcast %8 : vector<32x1xf32> to vector<32x128xf32>
    %10 = arith.mulf %0, %9 : vector<32x128xf32>
    %c0_3 = arith.constant 0 : index
    %c0_4 = arith.constant 0 : index
    %11 = vector.load %arg2[%c0_3, %c0_4] : memref<1x128xf32, #tpu.memory_space<vmem>>, vector<1x128xf32>
    %12 = vector.broadcast %11 : vector<1x128xf32> to vector<32x128xf32>
    %13 = arith.mulf %12, %10 : vector<32x128xf32>
    %c0_5 = arith.constant 0 : index
    %c0_6 = arith.constant 0 : index
    %14 = vector.load %arg3[%c0_5, %c0_6] : memref<32x128xf32, #tpu.memory_space<vmem>>, vector<32x128xf32>
    tpu.vector_store %arg3[%c0_5, %c0_6], %13 {strides = array<i32>} : memref<32x128xf32, #tpu.memory_space<vmem>>, vector<32x128xf32>,
    return
  }
  func.func @transform_0(%arg0: i32) -> (i32, i32) {
    %c0_i32 = arith.constant 0 : i32
    %c0_i32_0 = arith.constant 0 : i32
    return %arg0, %c0_i32 : i32, i32
  }
  func.func @transform_1(%arg0: i32) -> (i32, i32) {
    %c0_i32 = arith.constant 0 : i32
    %c0_i32_0 = arith.constant 0 : i32
    %c0_i32_1 = arith.constant 0 : i32
    return %c0_i32, %c0_i32_0 : i32, i32
  }
  func.func @transform_2(%arg0: i32) -> (i32, i32) {
    %c0_i32 = arith.constant 0 : i32
    %c0_i32_0 = arith.constant 0 : i32
    return %arg0, %c0_i32 : i32, i32
  }
}

</mosaic_0001>

<llo_original>
// kernel: tpu_custom_call.1
$region0: #{tpu_custom_call.1}
  #allocation0 [shape = 'u32[]', space=smem, size = 0x4, offset = 0x4, fixed_abs, tag = 'smem constant byte address 0x4 - core index']
  #allocation1 [shape = 'u32[144,128]{1,0:T(1,128)}', space=vmem, size = 0x12000, scoped, tag = 'internal scratch']
  %s0 = inlined_call_operand.hbm [shape: f32[128,128], index: 0, kind: input, shape index: {}]
  %s1 = inlined_call_operand.vmem [shape: f32[1,128], index: 1, kind: input, shape index: {}]
  %s2 = inlined_call_operand.hbm [shape: f32[128,128], index: 2, kind: output, shape index: {}]
  %s3 = sld [smem:[#allocation0]]
  $region45: #{tpu_custom_call.1} parent=0
    _
  %s5 = ssub.s32 1, %s3
  %s6 = scalar_select 0, %s5, %s3
  $region1: #{tpu_custom_call.1} parent=0
    #allocation2 [shape = 'u8[32768]{0}', space=vmem, size = 0x8000, scoped, tag = 'input window, operand 0']
    #allocation3 [shape = 's32[2]{0}', space=sflag, size = 0x8, scoped, tag = 'scoped memory for tpu_custom_call.1']
    #allocation4 [shape = 's32[2]{0}', space=sflag, size = 0x8, scoped, tag = 'scoped memory for tpu_custom_call.1']
    #allocation5 [shape = 'u8[32768]{0}', space=vmem, size = 0x8000, scoped, tag = 'output window, operand 0']
    %7 = vsyncpa [#allocation3], 0
    %s8 = scalar_lea.sflag [#allocation3], 1
    %9 = vsyncpa %s8, 0
    %10 = vsyncpa [#allocation4], 0
    %s11 = scalar_lea.sflag [#allocation4], 1
    %12 = vsyncpa %s11, 0
    loop: start=0, step=1, limit=6
    $region2: #{tpu_custom_call.1} parent=1 // loop_pre_header
      _
    $region3: #{tpu_custom_call.1} parent=1 // loop_header
      %s14 = sphi 0, %s18
      %p15 = scmp.ge.s32.totalorder %s14, 6
      %s24 = sphi 0, %s26
      %s27 = sphi 0, %s24
      %s28 = sphi 0, %s27
      %s44 = sphi 0, %s28
      %s48 = sphi 0, %s48
      %s50 = sphi 0, %s48
      %s51 = sphi 0, %s50
      %s65 = sphi 0, %s51
      %s71 = sphi 0, %s73
      %s74 = sphi 0, %s71
      %s75 = sphi 0, %s74
      %s91 = sphi 0, %s75
    $region4: #{tpu_custom_call.1} parent=1 // loop_header_branch
      %17 = sbr.rel (%p15) target = $region8
    $region5: #{tpu_custom_call.1} parent=1 // loop_body
      %s19 = ssub.s32 %s14, 1
      %s20 = ssub.s32 %s14, 2
      %s21 = sadd.s32 %s14, 1
      %s22 = ssub.s32 %s14, %s21
      %p23 = scmp.eq.s32.totalorder %s22, 0
      %s25 = sadd.s32 %s24, 1
      %s26 = scalar_select %p23, %s24, %s25
      %p29 = pneg %p23
      %p30 = scmp.eq.s32.totalorder %s14, 3
      %p31 = por %p29, %p30
      %p32 = scmp.ne.s32.totalorder %s24, %s27
      %p33 = scmp.eq.s32.totalorder %s14, 0
      %p34 = por %p32, %p33
      %p35 = scmp.ne.s32.totalorder %s24, %s27
      %p36 = scmp.eq.s32.totalorder %s19, 3
      %p37 = por %p35, %p36
      %p38 = scmp.ne.s32.totalorder %s27, %s28
      %p39 = scmp.eq.s32.totalorder %s19, 0
      %p40 = por %p38, %p39
      %p41 = scmp.ne.s32.totalorder %s27, %s28
      %p42 = scmp.eq.s32.totalorder %s20, 3
      %p43 = por %p41, %p42
      %p45 = scmp.ne.s32.totalorder %s28, %s44
      %p46 = scmp.eq.s32.totalorder %s20, 0
      %p47 = por %p45, %p46
      %s49 = sadd.s32 %s48, 1
      %p52 = scmp.eq.s32.totalorder %s14, 3
      %p53 = scmp.ne.s32.totalorder %s48, %s50
      %p54 = scmp.eq.s32.totalorder %s14, 0
      %p55 = por %p53, %p54
      %p56 = scmp.ne.s32.totalorder %s48, %s50
      %p57 = scmp.eq.s32.totalorder %s19, 3
      %p58 = por %p56, %p57
      %p59 = scmp.ne.s32.totalorder %s50, %s51
      %p60 = scmp.eq.s32.totalorder %s19, 0
      %p61 = por %p59, %p60
      %p62 = scmp.ne.s32.totalorder %s50, %s51
      %p63 = scmp.eq.s32.totalorder %s20, 3
      %p64 = por %p62, %p63
      %p66 = scmp.ne.s32.totalorder %s51, %s65
      %p67 = scmp.eq.s32.totalorder %s20, 0
      %p68 = por %p66, %p67
      %s69 = ssub.s32 %s14, %s21
      %p70 = scmp.eq.s32.totalorder %s69, 0
      %s72 = sadd.s32 %s71, 1
      %s73 = scalar_select %p70, %s71, %s72
      %p76 = pneg %p70
      %p77 = scmp.eq.s32.totalorder %s14, 3
      %p78 = por %p76, %p77
      %p79 = scmp.ne.s32.totalorder %s71, %s74
      %p80 = scmp.eq.s32.totalorder %s14, 0
      %p81 = por %p79, %p80
      %p82 = scmp.ne.s32.totalorder %s71, %s74
      %p83 = scmp.eq.s32.totalorder %s19, 3
      %p84 = por %p82, %p83
      %p85 = scmp.ne.s32.totalorder %s74, %s75
      %p86 = scmp.eq.s32.totalorder %s19, 0
      %p87 = por %p85, %p86
      %p88 = scmp.ne.s32.totalorder %s74, %s75
      %p89 = scmp.eq.s32.totalorder %s20, 3
      %p90 = por %p88, %p89
      %p92 = scmp.ne.s32.totalorder %s75, %s91
      %p93 = scmp.eq.s32.totalorder %s20, 0
      %p94 = por %p92, %p93
      %p95 = scmp.le.s32.totalorder 1, %s14
      %p96 = scmp.lt.s32.totalorder %s14, 5
      %p97 = pnand %p95, %p96
      %p98 = pneg %p97
      // Predicated region
      $region9: #{tpu_custom_call.1} parent=5 // pred_check
        _
      $region10: #{tpu_custom_call.1} parent=5 // pred_check_branch
        %100 = sbr.rel (%p97) target = $region12
      $region11: #{tpu_custom_call.1} parent=5 // pred_region
        %s101 = ssub.s32 %s14, 1
        // Predicated region
        $region13: #{tpu_custom_call.1} parent=11 // pred_check
          %p102 = pneg %p61
        $region14: #{tpu_custom_call.1} parent=11 // pred_check_branch
          %104 = sbr.rel (%p102) target = $region16
        $region15: #{tpu_custom_call.1} parent=11 // pred_region
          _
        $region16: #{tpu_custom_call.1} parent=11 // pred_fallthru
          _
      $region12: #{tpu_custom_call.1} parent=5 // pred_fallthru
        _
      %p105 = scmp.lt.s32.totalorder %s14, 4
      // Predicated region
      $region17: #{tpu_custom_call.1} parent=5 // pred_check
        %p106 = pneg %p105
      $region18: #{tpu_custom_call.1} parent=5 // pred_check_branch
        %108 = sbr.rel (%p106) target = $region20
      $region19: #{tpu_custom_call.1} parent=5 // pred_region
        // Predicated region
        $region21: #{tpu_custom_call.1} parent=19 // pred_check
          %p109 = pneg %p34
        $region22: #{tpu_custom_call.1} parent=19 // pred_check_branch
          %111 = sbr.rel (%p109) target = $region24
        $region23: #{tpu_custom_call.1} parent=19 // pred_region
          %s112 = sand.u32 %s24, 1
          %s113 = scalar_lea.sflag [#allocation3], %s112
          %s114 = sand.u32 %s24, 1
          %s115 = smul.addr %s114, 32
          %s116 = scalar_lea.vmem [#allocation2], %s115
          %s117 = smul.u32 4, %s14
          %s119 = ssub.s32 512, 512
          %120 = vsyncadd %s113, %s119
          %s121 = smul.addr %s117, 128
          %s122 = scalar_lea.hbm %s0, %s121
          %s123 = sshll.u32 %s116, 4
          %s124 = int_to_ptr.vmem [resolvable:$true] %s123
          %129 = dma.hbm_to_vmem [thread:$0]  %s122, 512, %s124, %s113, 128, 128, 8
        $region24: #{tpu_custom_call.1} parent=19 // pred_fallthru
          _
      $region20: #{tpu_custom_call.1} parent=5 // pred_fallthru
        _
      %p130 = scmp.le.s32.totalorder 1, %s14
      %p131 = scmp.lt.s32.totalorder %s14, 5
      %p132 = pnand %p130, %p131
      %p133 = pneg %p132
      // Predicated region
      $region25: #{tpu_custom_call.1} parent=5 // pred_check
        _
      $region26: #{tpu_custom_call.1} parent=5 // pred_check_branch
        %135 = sbr.rel (%p132) target = $region28
      $region27: #{tpu_custom_call.1} parent=5 // pred_region
        %s136 = ssub.s32 %s14, 1
        %s137 = sand.u32 %s27, 1
        %s138 = scalar_lea.sflag [#allocation3], %s137
        %s139 = sand.u32 %s27, 1
        %s140 = smul.addr %s139, 32
        %s141 = scalar_lea.vmem [#allocation2], %s140
        // Predicated region
        $region29: #{tpu_custom_call.1} parent=27 // pred_check
          %p142 = pneg %p40
        $region30: #{tpu_custom_call.1} parent=27 // pred_check_branch
          %144 = sbr.rel (%p142) target = $region32
        $region31: #{tpu_custom_call.1} parent=27 // pred_region
          %145 = dma.done %s138, 512
        $region32: #{tpu_custom_call.1} parent=27 // pred_fallthru
          _
        %s146 = sand.u32 %s27, 1
        %s147 = scalar_lea.sflag [#allocation3], %s146
        %s148 = sand.u32 %s27, 1
        %s149 = smul.addr %s148, 32
        %s150 = scalar_lea.vmem [#allocation2], %s149
        %p151 = pneg %p40
        %p152 = pneg %p37
        %p153 = pneg %p61
        %p154 = pneg %p58
        %p155 = pneg %p87
        %p156 = pneg %p84
        %s157 = sand.u32 %s74, 1
        %s158 = scalar_lea.sflag [#allocation4], %s157
        %s159 = sand.u32 %s74, 1
        %s160 = smul.addr %s159, 32
        %s161 = scalar_lea.vmem [#allocation5], %s160
        %s162 = smul.u32 4, %s19
        %s163 = smul.u32 4, %s19
        %v164 = vld [vmem:[%s141] sm:$0xff]
        %v165 = vld [vmem:[%s141 + $0x8] sm:$0xff]
        %v166 = vld [vmem:[%s141 + $0x10] sm:$0xff]
        %v167 = vld [vmem:[%s141 + $0x18] sm:$0xff]
        %v168 = vmul.f32 %v164, %v164
        %v169 = vmul.f32 %v165, %v165
        %v170 = vmul.f32 %v166, %v166
        %v171 = vmul.f32 %v167, %v167
        %172 = vadd.xlane.f32.xlu0 %v168
        %v173 = vpop.xlane.xlu0 %172
        %174 = vadd.xlane.f32.xlu0 %v169
        %v175 = vpop.xlane.xlu0 %174
        %176 = vadd.xlane.f32.xlu0 %v170
        %v177 = vpop.xlane.xlu0 %176
        %178 = vadd.xlane.f32.xlu0 %v171
        %v179 = vpop.xlane.xlu0 %178
        %v180 = vrcp.pop 128.0
        %v181 = vmul.f32 %v173, %v180
        %v182 = vmul.f32 %v175, %v180
        %v183 = vmul.f32 %v177, %v180
        %v184 = vmul.f32 %v179, %v180
        %v185 = vadd.f32 %v181, 1e-06
        %v186 = vadd.f32 %v182, 1e-06
        %v187 = vadd.f32 %v183, 1e-06
        %v188 = vadd.f32 %v184, 1e-06
        %v189 = vrsqrt.pop %v185
        %v190 = vrsqrt.pop %v186
        %v191 = vrsqrt.pop %v187
        %v192 = vrsqrt.pop %v188
        %v193 = vmul.f32 %v164, %v189
        %v194 = vmul.f32 %v165, %v190
        %v195 = vmul.f32 %v166, %v191
        %v196 = vmul.f32 %v167, %v192
        %v197 = vld [vmem:[%s1] sm:$0x1]
        %v199 = vlaneseq
        %v200 = vshrl.u32 %v199, 7
        %v201 = vsub.s32 0, %v200
        %v202 = vrot.slane %v197, %v201
        %v204 = vmul.f32 %v202, %v193
        %v205 = vmul.f32 %v202, %v194
        %v206 = vmul.f32 %v202, %v195
        %v207 = vmul.f32 %v202, %v196
        %208 = vst [vmem:[%s161] sm:$0xff] %v204
        %209 = vst [vmem:[%s161 + $0x8] sm:$0xff] %v205
        %210 = vst [vmem:[%s161 + $0x10] sm:$0xff] %v206
        %211 = vst [vmem:[%s161 + $0x18] sm:$0xff] %v207
        %s212 = sand.u32 %s74, 1
        %s213 = scalar_lea.sflag [#allocation4], %s212
        %s214 = sand.u32 %s74, 1
        %s215 = smul.addr %s214, 32
        %s216 = scalar_lea.vmem [#allocation5], %s215
        // Predicated region
        $region33: #{tpu_custom_call.1} parent=27 // pred_check
          %p217 = pneg %p84
        $region34: #{tpu_custom_call.1} parent=27 // pred_check_branch
          %219 = sbr.rel (%p217) target = $region36
        $region35: #{tpu_custom_call.1} parent=27 // pred_region
          %s220 = smul.u32 4, %s19
          %s222 = ssub.s32 512, 512
          %223 = vsyncadd %s213, %s222
          %s224 = smul.addr %s220, 128
          %s225 = scalar_lea.hbm %s2, %s224
          %s226 = sshll.u32 %s216, 4
          %s227 = int_to_ptr.vmem [resolvable:$true] %s226
          %232 = dma.vmem_to_hbm [thread:$0]  %s227, 512, %s225, %s213, 128, 128, 8
        $region36: #{tpu_custom_call.1} parent=27 // pred_fallthru
          _
      $region28: #{tpu_custom_call.1} parent=5 // pred_fallthru
        _
      %p233 = scmp.le.s32.totalorder 2, %s14
      // Predicated region
      $region37: #{tpu_custom_call.1} parent=5 // pred_check
        %p234 = pneg %p233
      $region38: #{tpu_custom_call.1} parent=5 // pred_check_branch
        %236 = sbr.rel (%p234) target = $region40
      $region39: #{tpu_custom_call.1} parent=5 // pred_region
        %s237 = ssub.s32 %s14, 2
        // Predicated region
        $region41: #{tpu_custom_call.1} parent=39 // pred_check
          %p238 = pneg %p90
        $region42: #{tpu_custom_call.1} parent=39 // pred_check_branch
          %240 = sbr.rel (%p238) target = $region44
        $region43: #{tpu_custom_call.1} parent=39 // pred_region
          %s241 = sand.u32 %s75, 1
          %s242 = scalar_lea.sflag [#allocation4], %s241
          %s243 = sand.u32 %s75, 1
          %s244 = smul.addr %s243, 32
          %s245 = scalar_lea.vmem [#allocation5], %s244
          %246 = dma.done %s242, 512
        $region44: #{tpu_custom_call.1} parent=39 // pred_fallthru
          _
      $region40: #{tpu_custom_call.1} parent=5 // pred_fallthru
        _
    $region6: #{tpu_custom_call.1} parent=1 // loop_footer
      %s18 = sadd.s32 1, %s14
    $region7: #{tpu_custom_call.1} parent=1 // loop_footer_branch
      %13 = sbr.rel target = $region3
    $region8: #{tpu_custom_call.1} parent=1 // loop_exit
      _
    %247 = vsyncpa [#allocation3], 1
    %s248 = scalar_lea.sflag [#allocation3], 1
    %249 = vsyncpa %s248, 1
    %250 = vsyncpa [#allocation4], 1
    %s251 = scalar_lea.sflag [#allocation4], 1
    %252 = vsyncpa %s251, 1

</llo_original>
